<compile_context>
chip_gen: v6e
topology: v6e:2x2x1
jax: 0.10.0
libtpu: 0.0.40
codegen_flags: <defaults>
</compile_context>

<pallas_src>
import jax
import jax.numpy as jnp
from jax.experimental import pallas as pl
from jax.experimental.pallas import tpu as pltpu


# ----------------------------------------------------------------------------
# Pallas kernel: the ModelIntegration hot path.
# Refs (per grid step, halves layout):
#   c_ref   : (1, M)        gate parameter
#   e1_ref  : (2, TB, M)    model1 embedding rows  [0]=first half, [1]=second half
#   e2_ref  : (2, TB, M)    model2 embedding rows
#   emb_ref : (2, TB, M)    blended embedding out
#   cos_ref : (1, TB)       per-row dot of the two halves (lane-dense)
# ----------------------------------------------------------------------------
def _integration_kernel(c_ref, e1_ref, e2_ref, emb_ref, cos_ref):
    # weight = sigmoid(c): EUP transcendental, computed once per grid step.
    w = jax.nn.sigmoid(c_ref[...].astype(jnp.float32))     # (1, M)
    w = w[None]                                            # (1, 1, M) -> broadcast

    e1 = e1_ref[...].astype(jnp.float32)                   # (2, TB, M)
    e2 = e2_ref[...].astype(jnp.float32)                   # (2, TB, M)

    # e1*w + e2*(1-w)  ==  e2 + (e1 - e2)*w   (3 VPU ops, one fewer live vreg)
    emb = e2 + (e1 - e2) * w
    emb_ref[...] = emb.astype(emb_ref.dtype)

    # Pairwise dot between the two halves; both halves are in this block so the
    # reduction is local.  Store lane-dense as (1, TB).
    cos_ref[...] = jnp.sum(emb[0] * emb[1], axis=1)[None, :]


def _pick_half_tile(bh: int) -> int:
    """Rows of the half-batch per grid step.

    Per block (3 arrays of (2, TB, 256) f32, double-buffered) ~= TB * 12 KiB,
    so TB=1024 is ~12 MiB: comfortably under the 32 MiB scoped-VMEM default,
    including on v7x (64 MiB physical).  Non-full tiles are kept multiples of
    128 so the lane-dense (1, TB) cos block satisfies the (8, 128) rule.
    """
    if bh <= 1024:
        return bh
    for tb in (1024, 512, 256, 128):
        if bh % tb == 0:
            return tb
    return bh  # odd sizes: single block fallback


def model_integration_pallas(embedding1, embedding2, c):
    """embedding1, embedding2: (B, M); c: (1, M).  Returns (cos (B//2,), emb (B, M))."""
    B, M = embedding1.shape
    assert B % 2 == 0, "batch must be even (module splits batch in half)"
    bh = B // 2
    tb = _pick_half_tile(bh)
    grid = (bh // tb,)

    # Halves layout: (2, B//2, M).  Row-major contiguous, so this reshape is free
    # and the matching half-batch rows land in the same block.
    e1h = embedding1.reshape(2, bh, M)
    e2h = embedding2.reshape(2, bh, M)

    emb_halves, cos_row = pl.pallas_call(
        _integration_kernel,
        out_shape=(
            jax.ShapeDtypeStruct((2, bh, M), embedding1.dtype),   # blended embedding
            jax.ShapeDtypeStruct((1, bh), jnp.float32),           # cos, lane-dense
        ),
        grid_spec=pltpu.PrefetchScalarGridSpec(
            num_scalar_prefetch=0,
            grid=grid,
            in_specs=[
                pl.BlockSpec((1, M), lambda i: (0, 0)),           # c (resident)
                pl.BlockSpec((2, tb, M), lambda i: (0, i, 0)),    # e1 halves
                pl.BlockSpec((2, tb, M), lambda i: (0, i, 0)),    # e2 halves
            ],
            out_specs=(
                pl.BlockSpec((2, tb, M), lambda i: (0, i, 0)),    # emb halves
                pl.BlockSpec((1, tb), lambda i: (0, i)),          # cos slab
            ),
        ),
        compiler_params=pltpu.CompilerParams(
            dimension_semantics=("parallel",),                    # 2 TCs on v7x
        ),
    )(c, e1h, e2h)

    cos = cos_row[0]                        # (B//2,) to match the PyTorch module
    embedding = emb_halves.reshape(B, M)    # free reshape back to (B, M)
    return cos, embedding


# ----------------------------------------------------------------------------
# Deterministic stand-ins for the opaque sub-models model1 / model2.
# Each returns (logits_unused, embedding) like the reference call convention.
# TODO(synk): model1/model2 internals are not defined in the reference module;
#             they are replaced by masked mean-pool + linear projections and are
#             deliberately NOT fused into the Pallas kernel (opaque in the spec).
# ----------------------------------------------------------------------------
def _submodel(frame_feature, mask, asr_title, w_frame, w_title):
    m = mask[..., None].astype(frame_feature.dtype)                 # (B, T, 1)
    pooled = jnp.sum(frame_feature * m, axis=1) / jnp.maximum(
        jnp.sum(m, axis=1), 1.0)                                    # (B, D)
    title_feat = jnp.mean(asr_title.astype(frame_feature.dtype), axis=1,
                          keepdims=True)                            # (B, 1)
    embedding = pooled @ w_frame + title_feat @ w_title             # (B, M)
    logits = jnp.zeros((frame_feature.shape[0], 1), frame_feature.dtype)
    return logits, embedding


if __name__ == "__main__":
    key = jax.random.PRNGKey(0)
    k1, k2, k3, k4, k5 = jax.random.split(key, 5)

    B, T, D, S, M = 8, 16, 32, 8, 256

    frame_feature = jax.random.normal(k1, (B, T, D), dtype=jnp.float32)
    mask = (jax.random.uniform(k2, (B, T)) > 0.2).astype(jnp.float32)
    asr_title = jax.random.randint(k3, (B, S), 0, 1000)

    # deterministic sub-model parameters
    w_frame1 = jax.random.normal(k4, (D, M), dtype=jnp.float32) * 0.05
    w_frame2 = jax.random.normal(k5, (D, M), dtype=jnp.float32) * 0.05
    w_title1 = jnp.full((1, M), 0.01, dtype=jnp.float32)
    w_title2 = jnp.full((1, M), -0.01, dtype=jnp.float32)

    # module parameter c (intended torch.ones(1, 256) * 0.7)
    c = jnp.full((1, M), 0.7, dtype=jnp.float32)

    _, embedding1 = _submodel(frame_feature, mask, asr_title, w_frame1, w_title1)
    _, embedding2 = _submodel(frame_feature, mask, asr_title, w_frame2, w_title2)

    cos, embedding = model_integration_pallas(embedding1, embedding2, c)
    jax.block_until_ready((cos, embedding))

    # reference check in plain JAX (original formulation)
    w = jax.nn.sigmoid(c)
    emb_ref = embedding1 * w + embedding2 * (1.0 - w)
    cos_ref = jnp.sum(emb_ref[: B // 2] * emb_ref[B // 2:], axis=1)
    assert embedding.shape == (B, M) and cos.shape == (B // 2,)
    assert jnp.allclose(embedding, emb_ref, atol=1e-5, rtol=1e-5)
    assert jnp.allclose(cos, cos_ref, atol=1e-4, rtol=1e-4)

    print("KERNEL_OK")
</pallas_src>

<mosaic_0001>
module attributes {stable_mosaic.version = 11 : i64} {
  func.func @_integration_kernel(%arg0: i32, %arg1: memref<1x256xf32, #tpu.memory_space<vmem>>, %arg2: memref<2x4x256xf32, #tpu.memory_space<vmem>>, %arg3: memref<2x4x256xf32, #tpu.memory_space<vmem>>, %arg4: memref<2x4x256xf32, #tpu.memory_space<vmem>>, %arg5: memref<1x4xf32, #tpu.memory_space<vmem>>) attributes {dimension_semantics = [#tpu.dimension_semantics<parallel>], iteration_bounds = array<i64: 1>, scalar_prefetch = 0 : i64, scratch_operands = 0 : i64, tpu.core_type = #tpu.core_type<tc>, window_params = [{pipeline_mode = #tpu.pipeline_mode<synchronous>, transform_indices = @transform_0, window_bounds = array<i64: 1, 256>}, {transform_indices = @transform_1, window_bounds = array<i64: 2, 4, 256>}, {transform_indices = @transform_2, window_bounds = array<i64: 2, 4, 256>}, {transform_indices = @transform_3, window_bounds = array<i64: 2, 4, 256>}, {transform_indices = @transform_4, window_bounds = array<i64: 1, 4>}]} {
    %c0 = arith.constant 0 : index
    %c0_0 = arith.constant 0 : index
    %0 = vector.load %arg1[%c0, %c0_0] : memref<1x256xf32, #tpu.memory_space<vmem>>, vector<1x256xf32>
    %1 = arith.negf %0 : vector<1x256xf32>
    %2 = math.exp %1 : vector<1x256xf32>
    %cst = arith.constant 1.000000e+00 : f32
    %3 = vector.broadcast %cst : f32 to vector<1x256xf32>
    %4 = arith.addf %3, %2 : vector<1x256xf32>
    %5 = arith.divf %3, %4 : vector<1x256xf32>
    %6 = vector.shape_cast %5 : vector<1x256xf32> to vector<1x1x256xf32>
    %c0_1 = arith.constant 0 : index
    %c0_2 = arith.constant 0 : index
    %c0_3 = arith.constant 0 : index
    %7 = vector.load %arg2[%c0_1, %c0_2, %c0_3] : memref<2x4x256xf32, #tpu.memory_space<vmem>>, vector<2x4x256xf32>
    %c0_4 = arith.constant 0 : index
    %c0_5 = arith.constant 0 : index
    %c0_6 = arith.constant 0 : index
    %8 = vector.load %arg3[%c0_4, %c0_5, %c0_6] : memref<2x4x256xf32, #tpu.memory_space<vmem>>, vector<2x4x256xf32>
    %9 = arith.subf %7, %8 : vector<2x4x256xf32>
    %10 = vector.broadcast %6 : vector<1x1x256xf32> to vector<2x4x256xf32>
    %11 = arith.mulf %9, %10 : vector<2x4x256xf32>
    %12 = arith.addf %8, %11 : vector<2x4x256xf32>
    %c0_7 = arith.constant 0 : index
    %c0_8 = arith.constant 0 : index
    %c0_9 = arith.constant 0 : index
    %13 = vector.load %arg4[%c0_7, %c0_8, %c0_9] : memref<2x4x256xf32, #tpu.memory_space<vmem>>, vector<2x4x256xf32>
    tpu.vector_store %arg4[%c0_7, %c0_8, %c0_9], %12 {strides = array<i32>} : memref<2x4x256xf32, #tpu.memory_space<vmem>>, vector<2x4x256xf32>,
    %14 = vector.extract_strided_slice %12 {offsets = [0, 0, 0], sizes = [1, 4, 256], strides = [1, 1, 1]} : vector<2x4x256xf32> to vector<1x4x256xf32>
    %15 = vector.shape_cast %14 : vector<1x4x256xf32> to vector<4x256xf32>
    %16 = vector.extract_strided_slice %12 {offsets = [1, 0, 0], sizes = [1, 4, 256], strides = [1, 1, 1]} : vector<2x4x256xf32> to vector<1x4x256xf32>
    %17 = vector.shape_cast %16 : vector<1x4x256xf32> to vector<4x256xf32>
    %18 = arith.mulf %15, %17 : vector<4x256xf32>
    %cst_10 = arith.constant dense<0.000000e+00> : vector<4xf32>
    %19 = vector.multi_reduction <add>, %18, %cst_10 [1] : vector<4x256xf32> to vector<4xf32>
    %20 = vector.shape_cast %19 : vector<4xf32> to vector<1x4xf32>
    %c0_11 = arith.constant 0 : index
    %c0_12 = arith.constant 0 : index
    %21 = vector.load %arg5[%c0_11, %c0_12] : memref<1x4xf32, #tpu.memory_space<vmem>>, vector<1x4xf32>
    tpu.vector_store %arg5[%c0_11, %c0_12], %20 {strides = array<i32>} : memref<1x4xf32, #tpu.memory_space<vmem>>, vector<1x4xf32>,
    return
  }
  func.func @transform_0(%arg0: i32) -> (i32, i32) {
    %c0_i32 = arith.constant 0 : i32
    %c0_i32_0 = arith.constant 0 : i32
    %c0_i32_1 = arith.constant 0 : i32
    return %c0_i32, %c0_i32_0 : i32, i32
  }
  func.func @transform_1(%arg0: i32) -> (i32, i32, i32) {
    %c0_i32 = arith.constant 0 : i32
    %c0_i32_0 = arith.constant 0 : i32
    %c0_i32_1 = arith.constant 0 : i32
    return %c0_i32, %arg0, %c0_i32_0 : i32, i32, i32
  }
  func.func @transform_2(%arg0: i32) -> (i32, i32, i32) {
    %c0_i32 = arith.constant 0 : i32
    %c0_i32_0 = arith.constant 0 : i32
    %c0_i32_1 = arith.constant 0 : i32
    return %c0_i32, %arg0, %c0_i32_0 : i32, i32, i32
  }
  func.func @transform_3(%arg0: i32) -> (i32, i32, i32) {
    %c0_i32 = arith.constant 0 : i32
    %c0_i32_0 = arith.constant 0 : i32
    %c0_i32_1 = arith.constant 0 : i32
    return %c0_i32, %arg0, %c0_i32_0 : i32, i32, i32
  }
  func.func @transform_4(%arg0: i32) -> (i32, i32) {
    %c0_i32 = arith.constant 0 : i32
    %c0_i32_0 = arith.constant 0 : i32
    return %c0_i32, %arg0 : i32, i32
  }
}

</mosaic_0001>

<llo_original>
// kernel: tpu_custom_call.1
$region0: #{tpu_custom_call.1}
  #allocation0 [shape = 'u32[]', space=smem, size = 0x4, offset = 0x4, fixed_abs, tag = 'smem constant byte address 0x4 - core index']
  #allocation1 [shape = 'u32[144,128]{1,0:T(1,128)}', space=vmem, size = 0x12000, scoped, tag = 'internal scratch']
  %s0 = inlined_call_operand.hbm [shape: f32[1,256], index: 0, kind: input, shape index: {}]
  %s1 = inlined_call_operand.hbm [shape: f32[2,4,256], index: 1, kind: input, shape index: {}]
  %s2 = inlined_call_operand.hbm [shape: f32[2,4,256], index: 2, kind: input, shape index: {}]
  %s3 = inlined_call_operand.hbm [shape: f32[2,4,256], index: 3, kind: output, shape index: {0}]
  %s4 = inlined_call_operand.hbm [shape: f32[1,4], index: 4, kind: output, shape index: {1}]
  %5 = xla_tuple %s3, %s4
  %s6 = sld [smem:[#allocation0]]
  $region42: #{tpu_custom_call.1} parent=0
    _
  %s8 = ssub.s32 1, %s6
  %s9 = scalar_select 0, %s8, %s6
  $region1: #{tpu_custom_call.1} parent=0
    #allocation2 [shape = 'u8[1024]{0}', space=vmem, size = 0x400, scoped, tag = 'input window, operand 0, single buffered']
    #allocation3 [shape = 's32[1]{0}', space=sflag, size = 0x4, scoped, tag = 'scoped memory for tpu_custom_call.1']
    #allocation4 [shape = 's32[1]{0}', space=sflag, size = 0x4, scoped, tag = 'scoped memory for tpu_custom_call.1']
    #allocation5 [shape = 'u8[8192]{0}', space=vmem, size = 0x2000, scoped, tag = 'input window, operand 1, single buffered']
    #allocation6 [shape = 's32[1]{0}', space=sflag, size = 0x4, scoped, tag = 'scoped memory for tpu_custom_call.1']
    #allocation7 [shape = 'u8[8192]{0}', space=vmem, size = 0x2000, scoped, tag = 'input window, operand 2, single buffered']
    #allocation8 [shape = 'u8[8192]{0}', space=vmem, size = 0x2000, scoped, tag = 'output window, operand 0, single buffered']
    #allocation9 [shape = 'u8[512]{0}', space=vmem, size = 0x400, scoped, tag = 'output window, operand 1, single buffered']
    #allocation10 [shape = 's32[1]{0}', space=sflag, size = 0x4, scoped, tag = 'scoped memory for tpu_custom_call.1']
    %10 = vsyncpa [#allocation3], 0
    %11 = vsyncpa [#allocation6], 0
    %12 = vsyncpa [#allocation4], 0
    %13 = vsyncpa [#allocation10], 0
    // Predicated region
    $region2: #{tpu_custom_call.1} parent=1 // pred_check
      _
    $region3: #{tpu_custom_call.1} parent=1 // pred_check_branch
      %15 = sbr.rel (0) target = $region5
    $region4: #{tpu_custom_call.1} parent=1 // pred_region
      %s17 = ssub.s32 32, 32
      %18 = vsyncadd [#allocation3], %s17
      %s20 = sshll.u32 [#allocation2], 4
      %s21 = int_to_ptr.vmem [resolvable:$true] %s20
      %23 = dma.hbm_to_vmem [thread:$0]  %s0, 32, %s21, [#allocation3]
    $region5: #{tpu_custom_call.1} parent=1 // pred_fallthru
      _
    // Predicated region
    $region6: #{tpu_custom_call.1} parent=1 // pred_check
      _
    $region7: #{tpu_custom_call.1} parent=1 // pred_check_branch
      %25 = sbr.rel (0) target = $region9
    $region8: #{tpu_custom_call.1} parent=1 // pred_region
      %s27 = ssub.s32 256, 256
      %28 = vsyncadd [#allocation6], %s27
      %s29 = sshll.u32 [#allocation5], 4
      %s30 = int_to_ptr.vmem [resolvable:$true] %s29
      %35 = dma.hbm_to_vmem [thread:$0]  %s1, 256, %s30, [#allocation6], 128, 128, 8
    $region9: #{tpu_custom_call.1} parent=1 // pred_fallthru
      _
    // Predicated region
    $region10: #{tpu_custom_call.1} parent=1 // pred_check
      _
    $region11: #{tpu_custom_call.1} parent=1 // pred_check_branch
      %37 = sbr.rel (0) target = $region13
    $region12: #{tpu_custom_call.1} parent=1 // pred_region
      %s39 = ssub.s32 256, 256
      %40 = vsyncadd [#allocation6], %s39
      %s41 = sshll.u32 [#allocation7], 4
      %s42 = int_to_ptr.vmem [resolvable:$true] %s41
      %47 = dma.hbm_to_vmem [thread:$0]  %s2, 256, %s42, [#allocation6], 128, 128, 8
    $region13: #{tpu_custom_call.1} parent=1 // pred_fallthru
      _
    // Predicated region
    $region14: #{tpu_custom_call.1} parent=1 // pred_check
      _
    $region15: #{tpu_custom_call.1} parent=1 // pred_check_branch
      %49 = sbr.rel (0) target = $region17
    $region16: #{tpu_custom_call.1} parent=1 // pred_region
      %50 = dma.done [#allocation3], 32
    $region17: #{tpu_custom_call.1} parent=1 // pred_fallthru
      _
    // Predicated region
    $region18: #{tpu_custom_call.1} parent=1 // pred_check
      _
    $region19: #{tpu_custom_call.1} parent=1 // pred_check_branch
      %52 = sbr.rel (0) target = $region21
    $region20: #{tpu_custom_call.1} parent=1 // pred_region
      %53 = dma.done [#allocation6], 256
    $region21: #{tpu_custom_call.1} parent=1 // pred_fallthru
      _
    // Predicated region
    $region22: #{tpu_custom_call.1} parent=1 // pred_check
      _
    $region23: #{tpu_custom_call.1} parent=1 // pred_check_branch
      %55 = sbr.rel (0) target = $region25
    $region24: #{tpu_custom_call.1} parent=1 // pred_region
      %56 = dma.done [#allocation6], 256
    $region25: #{tpu_custom_call.1} parent=1 // pred_fallthru
      _
    %v57 = vld [vmem:[#allocation2] sm:$0x3]
    %v58 = vxor.u32 %v57, 2147483648
    %v59 = vmul.f32 %v58, 1.442695
    %v60 = vpow.pop %v59
    %v61 = vadd.f32 %v60, 1.0
    %v62 = vrcp.pop %v61
    %v63 = vmul.f32 1.0, %v62
    %v64 = vld [vmem:[#allocation5] sm:$0xff]
    %v65 = vld [vmem:[#allocation5 + $0x8] sm:$0xff]
    %v66 = vld [vmem:[#allocation7] sm:$0xff]
    %v67 = vld [vmem:[#allocation7 + $0x8] sm:$0xff]
    %v68 = vsub.f32 %v64, %v66
    %v69 = vsub.f32 %v65, %v67
    %v71 = vlaneseq
    %v72 = vshrl.u32 %v71, 7
    %v73 = vsub.s32 0, %v72
    %v74 = vrot.slane %v63, %v73
    %v75 = vlaneseq
    %v76 = vshrl.u32 %v75, 7
    %v77 = vsub.s32 1, %v76
    %v78 = vrot.slane %v63, %v77
    %v79 = vcombine.low %v74, %v78
    %v81 = vmul.f32 %v68, %v79
    %v82 = vmul.f32 %v69, %v79
    %v83 = vadd.f32 %v66, %v81
    %v84 = vadd.f32 %v67, %v82
    %85 = vst [vmem:[#allocation8] sm:$0xff] %v83
    %86 = vst [vmem:[#allocation8 + $0x8] sm:$0xff] %v84
    %v87 = vmul.f32 %v83, %v84
    %v89 = vcombine.high %v87, %v87
    %vm91 = vcmask 1043456
    %v92 = vsel %vm91, %v87, 0.0
    %v93 = vsel %vm91, %v89, 0.0
    %v94 = vadd.f32 %v92, %v93
    %95 = vadd.xlane.f32.xlu0 %v94
    %v96 = vpop.xlane.xlu0 %95
    %v98 = vlaneseq
    %v99 = vand.u32 %v98, 127
    %v100 = vlaneseq
    %v101 = vshrl.u32 %v100, 7
    %v102 = vsub.s32 %v99, %v101
    %v103 = vrot.slane %v96, %v102
    %vm105 = vcmask 24576
    %106 = vst.msk [vmem:[#allocation9] sm:$0x1] %vm105, %v103
    // Predicated region
    $region26: #{tpu_custom_call.1} parent=1 // pred_check
      _
    $region27: #{tpu_custom_call.1} parent=1 // pred_check_branch
      %108 = sbr.rel (0) target = $region29
    $region28: #{tpu_custom_call.1} parent=1 // pred_region
      %s110 = ssub.s32 256, 256
      %111 = vsyncadd [#allocation4], %s110
      %s112 = sshll.u32 [#allocation8], 4
      %s113 = int_to_ptr.vmem [resolvable:$true] %s112
      %118 = dma.vmem_to_hbm [thread:$0]  %s113, 256, %s3, [#allocation4], 128, 128, 8
    $region29: #{tpu_custom_call.1} parent=1 // pred_fallthru
      _
    // Predicated region
    $region30: #{tpu_custom_call.1} parent=1 // pred_check
      _
    $region31: #{tpu_custom_call.1} parent=1 // pred_check_branch
      %120 = sbr.rel (0) target = $region33
    $region32: #{tpu_custom_call.1} parent=1 // pred_region
      %s122 = ssub.s32 16, 16
      %123 = vsyncadd [#allocation10], %s122
      %s125 = sshll.u32 [#allocation9], 4
      %s126 = int_to_ptr.vmem [resolvable:$true] %s125
      %128 = dma.vmem_to_hbm [thread:$0]  %s126, 16, %s4, [#allocation10]
    $region33: #{tpu_custom_call.1} parent=1 // pred_fallthru
      _
    // Predicated region
    $region34: #{tpu_custom_call.1} parent=1 // pred_check
      _
    $region35: #{tpu_custom_call.1} parent=1 // pred_check_branch
      %130 = sbr.rel (0) target = $region37
    $region36: #{tpu_custom_call.1} parent=1 // pred_region
      %131 = dma.done [#allocation4], 256
    $region37: #{tpu_custom_call.1} parent=1 // pred_fallthru
      _
    // Predicated region
    $region38: #{tpu_custom_call.1} parent=1 // pred_check
      _
    $region39: #{tpu_custom_call.1} parent=1 // pred_check_branch
      %133 = sbr.rel (0) target = $region41
    $region40: #{tpu_custom_call.1} parent=1 // pred_region
      %134 = dma.done [#allocation10], 16
    $region41: #{tpu_custom_call.1} parent=1 // pred_fallthru
      _
    %135 = vsyncpa [#allocation3], 1
    %136 = vsyncpa [#allocation6], 1
    %137 = vsyncpa [#allocation4], 1
    %138 = vsyncpa [#allocation10], 1

</llo_original>
